<compile_context>
chip_gen: v6e
topology: v6e:2x2x1
jax: 0.10.0
libtpu: 0.0.40
codegen_flags: <defaults>
</compile_context>

<pallas_src>
import functools

import jax
import jax.numpy as jnp
from jax.experimental import pallas as pl
from jax.experimental.pallas import tpu as pltpu


def _kfold_kernel(wb_ref, x_ref, o_ref, *, num_batch, num_folds, num_ch,
                  agg_mode):
    # wb_ref: (K, C+1) per-fold 1x1-conv weights, bias folded in as column C
    # x_ref : (N*C, T) input tile, spatial dim on lanes, sublane-dense
    # o_ref : (N, T)   aggregated heatmap tile
    wb = wb_ref[...]
    half = jnp.float32(0.5)

    for n in range(num_batch):            # static unroll (N=2)
        # Per-fold pre-activations via VPU broadcast-FMA: (K,1)*(1,T)
        # accumulated over C channels; bias is the last column of wb.
        h = wb[:, num_ch:num_ch + 1]       # (K, 1) bias, broadcast on add
        for c in range(num_ch):            # static unroll (C=4)
            r = n * num_ch + c
            h = h + wb[:, c:c + 1] * x_ref[r:r + 1, :]   # -> (K, T)

        # sigmoid(h) = 0.5*tanh(0.5*h) + 0.5; do the tanh per fold (1 EUP push
        # per fold) and hoist the monotone affine past the fold aggregation.
        t = jnp.tanh(half * h)

        # torch.nan_to_num(nan=0, posinf=1, neginf=0) on the sigmoid output:
        # tanh is bounded in [-1, 1] (tanh(+/-inf) = +/-1), so only the NaN
        # select is live; NaN -> -1 == sigmoid value 0 after the affine.
        t = jnp.where(jnp.isnan(t), jnp.float32(-1.0), t)

        if agg_mode == "avg":
            agg = jnp.sum(t, axis=0, keepdims=True)      # (1, T), XLU reduce
            agg = agg * jnp.float32(1.0 / num_folds)
        elif agg_mode == "max":
            agg = jnp.max(t, axis=0, keepdims=True)      # (1, T)
        else:
            raise ValueError(agg_mode)

        # Undo the hoisted affine and store this batch row directly
        # (lane-dense, no concatenate epilogue).
        o_ref[n:n + 1, :] = (half * agg + half).astype(o_ref.dtype)


def _pick_tile(hw):
    # Largest lane-dense tile (multiple of 128, capped at 2048) dividing HW.
    for cand in (2048, 1024, 512, 256, 128):
        if hw % cand == 0:
            return cand
    return hw  # unaligned / tiny spatial size: single full-width tile


def kfold_forward(x_nchw, fold_w, fold_b, *, heatmap_agg_mode="avg"):
    """x_nchw: (N, C, H, W) f32; fold_w: (K, C); fold_b: (K, 1) or (K,)."""
    N, C, H, W = x_nchw.shape
    K = fold_w.shape[0]
    HW = H * W

    tile = _pick_tile(HW)
    num_tiles = HW // tile

    # Free contiguous view: NCHW -> (N*C, H*W). Sublane-dense (8 rows for
    # N=2, C=4), spatial on lanes, no host-side transpose.
    x_view = x_nchw.reshape(N * C, HW)
    # Fold bias into the weight array: one tiny resident (K, C+1) block.
    wb = jnp.concatenate(
        [fold_w, fold_b.reshape(K, 1)], axis=1
    ).astype(jnp.float32)

    kernel = functools.partial(
        _kfold_kernel,
        num_batch=N, num_folds=K, num_ch=C, agg_mode=heatmap_agg_mode,
    )

    out_flat = pl.pallas_call(
        kernel,
        out_shape=jax.ShapeDtypeStruct((N, HW), jnp.float32),
        grid=(num_tiles,),
        in_specs=[
            # Weights: constant block index -> stays resident across the grid.
            pl.BlockSpec((K, C + 1), lambda t: (0, 0)),
            # Input: (N*C, T) sublane-dense, lane-dense spatial tile.
            pl.BlockSpec((N * C, tile), lambda t: (0, t)),
        ],
        out_specs=pl.BlockSpec((N, tile), lambda t: (0, t)),
        compiler_params=pltpu.CompilerParams(
            dimension_semantics=("parallel",),   # shards tiles across TCs (v7x)
            vmem_limit_bytes=32 * 1024 * 1024,   # within scoped default on all gens
        ),
    )(wb, x_view)

    # (N, H*W) -> (N, 1, H, W)
    return out_flat.reshape(N, 1, H, W)


def _reference(x_nchw, fold_w, fold_b, heatmap_agg_mode="avg"):
    # Pure-JAX reference mirroring the torch wrapper semantics.
    h = jnp.einsum("kc,nchw->knhw", fold_w, x_nchw) + fold_b.reshape(-1, 1, 1, 1)
    h = jax.nn.sigmoid(h)
    h = jnp.nan_to_num(h, nan=0.0, posinf=1.0, neginf=0.0)
    if heatmap_agg_mode == "avg":
        agg = jnp.mean(h, axis=0)
    elif heatmap_agg_mode == "max":
        agg = jnp.max(h, axis=0)
    else:
        raise ValueError(heatmap_agg_mode)
    return agg[:, None, :, :]


if __name__ == "__main__":
    key = jax.random.PRNGKey(0)
    k_x, k_w, k_b = jax.random.split(key, 3)

    N, C, H, W = 2, 4, 16, 16
    NUM_FOLDS = 5

    x = jax.random.normal(k_x, (N, C, H, W), dtype=jnp.float32)
    # Exercise the nan_to_num path.
    x = x.at[0, 0, 0, :3].set(jnp.nan)
    # Deterministic synthetic per-fold 1x1-conv head params.
    fold_w = jax.random.normal(k_w, (NUM_FOLDS, C), dtype=jnp.float32) * 0.5
    fold_b = jax.random.normal(k_b, (NUM_FOLDS, 1), dtype=jnp.float32) * 0.1

    for mode in ("avg", "max"):
        out = jax.block_until_ready(
            kfold_forward(x, fold_w, fold_b, heatmap_agg_mode=mode)
        )
        ref = _reference(x, fold_w, fold_b, heatmap_agg_mode=mode)
        assert out.shape == (N, 1, H, W), out.shape
        # tanh-form sigmoid is exact (no approx reciprocal): tight tolerance.
        assert bool(jnp.allclose(out, ref, atol=1e-5, rtol=1e-5)), mode

    print("KERNEL_OK")
</pallas_src>

<mosaic_0001>
module attributes {stable_mosaic.version = 11 : i64} {
  func.func @_kfold_kernel(%arg0: i32, %arg1: memref<5x5xf32, #tpu.memory_space<vmem>>, %arg2: memref<8x256xf32, #tpu.memory_space<vmem>>, %arg3: memref<2x256xf32, #tpu.memory_space<vmem>>) attributes {dimension_semantics = [#tpu.dimension_semantics<parallel>], iteration_bounds = array<i64: 1>, scalar_prefetch = 0 : i64, scratch_operands = 0 : i64, tpu.core_type = #tpu.core_type<tc>, window_params = [{pipeline_mode = #tpu.pipeline_mode<synchronous>, transform_indices = @transform_0, window_bounds = array<i64: 5, 5>}, {transform_indices = @transform_1, window_bounds = array<i64: 8, 256>}, {transform_indices = @transform_2, window_bounds = array<i64: 2, 256>}]} {
    %c0 = arith.constant 0 : index
    %c0_0 = arith.constant 0 : index
    %0 = vector.load %arg1[%c0, %c0_0] : memref<5x5xf32, #tpu.memory_space<vmem>>, vector<5x5xf32>
    %1 = vector.extract_strided_slice %0 {offsets = [0, 4], sizes = [5, 1], strides = [1, 1]} : vector<5x5xf32> to vector<5x1xf32>
    %2 = vector.extract_strided_slice %0 {offsets = [0, 0], sizes = [5, 1], strides = [1, 1]} : vector<5x5xf32> to vector<5x1xf32>
    %c0_1 = arith.constant 0 : index
    %c0_2 = arith.constant 0 : index
    %3 = vector.load %arg2[%c0_1, %c0_2] : memref<8x256xf32, #tpu.memory_space<vmem>>, vector<1x256xf32>
    %4 = vector.broadcast %2 : vector<5x1xf32> to vector<5x256xf32>
    %5 = vector.broadcast %3 : vector<1x256xf32> to vector<5x256xf32>
    %6 = arith.mulf %4, %5 : vector<5x256xf32>
    %7 = vector.broadcast %1 : vector<5x1xf32> to vector<5x256xf32>
    %8 = arith.addf %7, %6 : vector<5x256xf32>
    %9 = vector.extract_strided_slice %0 {offsets = [0, 1], sizes = [5, 1], strides = [1, 1]} : vector<5x5xf32> to vector<5x1xf32>
    %c1 = arith.constant 1 : index
    %c0_3 = arith.constant 0 : index
    %10 = vector.load %arg2[%c1, %c0_3] : memref<8x256xf32, #tpu.memory_space<vmem>>, vector<1x256xf32>
    %11 = vector.broadcast %9 : vector<5x1xf32> to vector<5x256xf32>
    %12 = vector.broadcast %10 : vector<1x256xf32> to vector<5x256xf32>
    %13 = arith.mulf %11, %12 : vector<5x256xf32>
    %14 = arith.addf %8, %13 : vector<5x256xf32>
    %15 = vector.extract_strided_slice %0 {offsets = [0, 2], sizes = [5, 1], strides = [1, 1]} : vector<5x5xf32> to vector<5x1xf32>
    %c2 = arith.constant 2 : index
    %c0_4 = arith.constant 0 : index
    %16 = vector.load %arg2[%c2, %c0_4] : memref<8x256xf32, #tpu.memory_space<vmem>>, vector<1x256xf32>
    %17 = vector.broadcast %15 : vector<5x1xf32> to vector<5x256xf32>
    %18 = vector.broadcast %16 : vector<1x256xf32> to vector<5x256xf32>
    %19 = arith.mulf %17, %18 : vector<5x256xf32>
    %20 = arith.addf %14, %19 : vector<5x256xf32>
    %21 = vector.extract_strided_slice %0 {offsets = [0, 3], sizes = [5, 1], strides = [1, 1]} : vector<5x5xf32> to vector<5x1xf32>
    %c3 = arith.constant 3 : index
    %c0_5 = arith.constant 0 : index
    %22 = vector.load %arg2[%c3, %c0_5] : memref<8x256xf32, #tpu.memory_space<vmem>>, vector<1x256xf32>
    %23 = vector.broadcast %21 : vector<5x1xf32> to vector<5x256xf32>
    %24 = vector.broadcast %22 : vector<1x256xf32> to vector<5x256xf32>
    %25 = arith.mulf %23, %24 : vector<5x256xf32>
    %26 = arith.addf %20, %25 : vector<5x256xf32>
    %cst = arith.constant 5.000000e-01 : f32
    %27 = vector.broadcast %cst : f32 to vector<5x256xf32>
    %28 = arith.mulf %27, %26 : vector<5x256xf32>
    %29 = math.tanh %28 : vector<5x256xf32>
    %30 = arith.cmpf one, %29, %29 : vector<5x256xf32>
    %cst_6 = arith.constant -1.000000e+00 : f32
    %31 = vector.broadcast %cst_6 : f32 to vector<5x256xf32>
    %32 = arith.select %30, %31, %29 : vector<5x256xi1>, vector<5x256xf32>
    %cst_7 = arith.constant dense<0.000000e+00> : vector<256xf32>
    %33 = vector.multi_reduction <add>, %32, %cst_7 [0] : vector<5x256xf32> to vector<256xf32>
    %34 = vector.shape_cast %33 : vector<256xf32> to vector<1x256xf32>
    %cst_8 = arith.constant 2.000000e-01 : f32
    %35 = vector.broadcast %cst_8 : f32 to vector<1x256xf32>
    %36 = arith.mulf %34, %35 : vector<1x256xf32>
    %cst_9 = arith.constant 5.000000e-01 : f32
    %37 = vector.broadcast %cst_9 : f32 to vector<1x256xf32>
    %38 = arith.mulf %37, %36 : vector<1x256xf32>
    %cst_10 = arith.constant 5.000000e-01 : f32
    %39 = vector.broadcast %cst_10 : f32 to vector<1x256xf32>
    %40 = arith.addf %38, %39 : vector<1x256xf32>
    %c0_11 = arith.constant 0 : index
    %c0_12 = arith.constant 0 : index
    %41 = vector.load %arg3[%c0_11, %c0_12] : memref<2x256xf32, #tpu.memory_space<vmem>>, vector<1x256xf32>
    tpu.vector_store %arg3[%c0_11, %c0_12], %40 {strides = array<i32>} : memref<2x256xf32, #tpu.memory_space<vmem>>, vector<1x256xf32>,
    %42 = vector.extract_strided_slice %0 {offsets = [0, 4], sizes = [5, 1], strides = [1, 1]} : vector<5x5xf32> to vector<5x1xf32>
    %43 = vector.extract_strided_slice %0 {offsets = [0, 0], sizes = [5, 1], strides = [1, 1]} : vector<5x5xf32> to vector<5x1xf32>
    %c4 = arith.constant 4 : index
    %c0_13 = arith.constant 0 : index
    %44 = vector.load %arg2[%c4, %c0_13] : memref<8x256xf32, #tpu.memory_space<vmem>>, vector<1x256xf32>
    %45 = vector.broadcast %43 : vector<5x1xf32> to vector<5x256xf32>
    %46 = vector.broadcast %44 : vector<1x256xf32> to vector<5x256xf32>
    %47 = arith.mulf %45, %46 : vector<5x256xf32>
    %48 = vector.broadcast %42 : vector<5x1xf32> to vector<5x256xf32>
    %49 = arith.addf %48, %47 : vector<5x256xf32>
    %50 = vector.extract_strided_slice %0 {offsets = [0, 1], sizes = [5, 1], strides = [1, 1]} : vector<5x5xf32> to vector<5x1xf32>
    %c5 = arith.constant 5 : index
    %c0_14 = arith.constant 0 : index
    %51 = vector.load %arg2[%c5, %c0_14] : memref<8x256xf32, #tpu.memory_space<vmem>>, vector<1x256xf32>
    %52 = vector.broadcast %50 : vector<5x1xf32> to vector<5x256xf32>
    %53 = vector.broadcast %51 : vector<1x256xf32> to vector<5x256xf32>
    %54 = arith.mulf %52, %53 : vector<5x256xf32>
    %55 = arith.addf %49, %54 : vector<5x256xf32>
    %56 = vector.extract_strided_slice %0 {offsets = [0, 2], sizes = [5, 1], strides = [1, 1]} : vector<5x5xf32> to vector<5x1xf32>
    %c6 = arith.constant 6 : index
    %c0_15 = arith.constant 0 : index
    %57 = vector.load %arg2[%c6, %c0_15] : memref<8x256xf32, #tpu.memory_space<vmem>>, vector<1x256xf32>
    %58 = vector.broadcast %56 : vector<5x1xf32> to vector<5x256xf32>
    %59 = vector.broadcast %57 : vector<1x256xf32> to vector<5x256xf32>
    %60 = arith.mulf %58, %59 : vector<5x256xf32>
    %61 = arith.addf %55, %60 : vector<5x256xf32>
    %62 = vector.extract_strided_slice %0 {offsets = [0, 3], sizes = [5, 1], strides = [1, 1]} : vector<5x5xf32> to vector<5x1xf32>
    %c7 = arith.constant 7 : index
    %c0_16 = arith.constant 0 : index
    %63 = vector.load %arg2[%c7, %c0_16] : memref<8x256xf32, #tpu.memory_space<vmem>>, vector<1x256xf32>
    %64 = vector.broadcast %62 : vector<5x1xf32> to vector<5x256xf32>
    %65 = vector.broadcast %63 : vector<1x256xf32> to vector<5x256xf32>
    %66 = arith.mulf %64, %65 : vector<5x256xf32>
    %67 = arith.addf %61, %66 : vector<5x256xf32>
    %cst_17 = arith.constant 5.000000e-01 : f32
    %68 = vector.broadcast %cst_17 : f32 to vector<5x256xf32>
    %69 = arith.mulf %68, %67 : vector<5x256xf32>
    %70 = math.tanh %69 : vector<5x256xf32>
    %71 = arith.cmpf one, %70, %70 : vector<5x256xf32>
    %cst_18 = arith.constant -1.000000e+00 : f32
    %72 = vector.broadcast %cst_18 : f32 to vector<5x256xf32>
    %73 = arith.select %71, %72, %70 : vector<5x256xi1>, vector<5x256xf32>
    %cst_19 = arith.constant dense<0.000000e+00> : vector<256xf32>
    %74 = vector.multi_reduction <add>, %73, %cst_19 [0] : vector<5x256xf32> to vector<256xf32>
    %75 = vector.shape_cast %74 : vector<256xf32> to vector<1x256xf32>
    %cst_20 = arith.constant 2.000000e-01 : f32
    %76 = vector.broadcast %cst_20 : f32 to vector<1x256xf32>
    %77 = arith.mulf %75, %76 : vector<1x256xf32>
    %cst_21 = arith.constant 5.000000e-01 : f32
    %78 = vector.broadcast %cst_21 : f32 to vector<1x256xf32>
    %79 = arith.mulf %78, %77 : vector<1x256xf32>
    %cst_22 = arith.constant 5.000000e-01 : f32
    %80 = vector.broadcast %cst_22 : f32 to vector<1x256xf32>
    %81 = arith.addf %79, %80 : vector<1x256xf32>
    %c1_23 = arith.constant 1 : index
    %c0_24 = arith.constant 0 : index
    %82 = vector.load %arg3[%c1_23, %c0_24] : memref<2x256xf32, #tpu.memory_space<vmem>>, vector<1x256xf32>
    tpu.vector_store %arg3[%c1_23, %c0_24], %81 {strides = array<i32>} : memref<2x256xf32, #tpu.memory_space<vmem>>, vector<1x256xf32>,
    return
  }
  func.func @transform_0(%arg0: i32) -> (i32, i32) {
    %c0_i32 = arith.constant 0 : i32
    %c0_i32_0 = arith.constant 0 : i32
    %c0_i32_1 = arith.constant 0 : i32
    return %c0_i32, %c0_i32_0 : i32, i32
  }
  func.func @transform_1(%arg0: i32) -> (i32, i32) {
    %c0_i32 = arith.constant 0 : i32
    %c0_i32_0 = arith.constant 0 : i32
    return %c0_i32, %arg0 : i32, i32
  }
  func.func @transform_2(%arg0: i32) -> (i32, i32) {
    %c0_i32 = arith.constant 0 : i32
    %c0_i32_0 = arith.constant 0 : i32
    return %c0_i32, %arg0 : i32, i32
  }
}

</mosaic_0001>

<llo_original>
// kernel: tpu_custom_call.1
$region0: #{tpu_custom_call.1}
  #allocation0 [shape = 'u32[]', space=smem, size = 0x4, offset = 0x4, fixed_abs, tag = 'smem constant byte address 0x4 - core index']
  #allocation1 [shape = 'u32[144,128]{1,0:T(1,128)}', space=vmem, size = 0x12000, scoped, tag = 'internal scratch']
  %s0 = inlined_call_operand.hbm [shape: f32[5,5], index: 0, kind: input, shape index: {}]
  %s1 = inlined_call_operand.hbm [shape: f32[8,256], index: 1, kind: input, shape index: {}]
  %s2 = inlined_call_operand.hbm [shape: f32[2,256], index: 2, kind: output, shape index: {}]
  %s3 = sld [smem:[#allocation0]]
  $region26: #{tpu_custom_call.1} parent=0
    _
  %s5 = ssub.s32 1, %s3
  %s6 = scalar_select 0, %s5, %s3
  $region1: #{tpu_custom_call.1} parent=0
    #allocation2 [shape = 'u8[4096]{0}', space=vmem, size = 0x1000, scoped, tag = 'input window, operand 0, single buffered']
    #allocation3 [shape = 's32[1]{0}', space=sflag, size = 0x4, scoped, tag = 'scoped memory for tpu_custom_call.1']
    #allocation4 [shape = 's32[1]{0}', space=sflag, size = 0x4, scoped, tag = 'scoped memory for tpu_custom_call.1']
    #allocation5 [shape = 'u8[8192]{0}', space=vmem, size = 0x2000, scoped, tag = 'input window, operand 1, single buffered']
    #allocation6 [shape = 's32[1]{0}', space=sflag, size = 0x4, scoped, tag = 'scoped memory for tpu_custom_call.1']
    #allocation7 [shape = 'u8[2048]{0}', space=vmem, size = 0x800, scoped, tag = 'output window, operand 0, single buffered']
    %7 = vsyncpa [#allocation3], 0
    %8 = vsyncpa [#allocation6], 0
    %9 = vsyncpa [#allocation4], 0
    // Predicated region
    $region2: #{tpu_custom_call.1} parent=1 // pred_check
      _
    $region3: #{tpu_custom_call.1} parent=1 // pred_check_branch
      %11 = sbr.rel (0) target = $region5
    $region4: #{tpu_custom_call.1} parent=1 // pred_region
      %s13 = ssub.s32 128, 128
      %14 = vsyncadd [#allocation3], %s13
      %s16 = sshll.u32 [#allocation2], 4
      %s17 = int_to_ptr.vmem [resolvable:$true] %s16
      %19 = dma.hbm_to_vmem [thread:$0]  %s0, 128, %s17, [#allocation3]
    $region5: #{tpu_custom_call.1} parent=1 // pred_fallthru
      _
    // Predicated region
    $region6: #{tpu_custom_call.1} parent=1 // pred_check
      _
    $region7: #{tpu_custom_call.1} parent=1 // pred_check_branch
      %21 = sbr.rel (0) target = $region9
    $region8: #{tpu_custom_call.1} parent=1 // pred_region
      %s23 = ssub.s32 256, 256
      %24 = vsyncadd [#allocation6], %s23
      %s26 = sshll.u32 [#allocation5], 4
      %s27 = int_to_ptr.vmem [resolvable:$true] %s26
      %29 = dma.hbm_to_vmem [thread:$0]  %s1, 256, %s27, [#allocation6]
    $region9: #{tpu_custom_call.1} parent=1 // pred_fallthru
      _
    // Predicated region
    $region10: #{tpu_custom_call.1} parent=1 // pred_check
      _
    $region11: #{tpu_custom_call.1} parent=1 // pred_check_branch
      %31 = sbr.rel (0) target = $region13
    $region12: #{tpu_custom_call.1} parent=1 // pred_region
      %32 = dma.done [#allocation3], 128
    $region13: #{tpu_custom_call.1} parent=1 // pred_fallthru
      _
    // Predicated region
    $region14: #{tpu_custom_call.1} parent=1 // pred_check
      _
    $region15: #{tpu_custom_call.1} parent=1 // pred_check_branch
      %34 = sbr.rel (0) target = $region17
    $region16: #{tpu_custom_call.1} parent=1 // pred_region
      %35 = dma.done [#allocation6], 256
    $region17: #{tpu_custom_call.1} parent=1 // pred_fallthru
      _
    %v36 = vld [vmem:[#allocation2] sm:$0x1f]
    %v37 = vld [vmem:[#allocation5] ss:$8 sm:$0x3]
    %39 = vset.pattern.permute.xlu0 0
    %40 = vperm.xlu0 %39, %v36
    %v41 = vpop.permute.xlu0 %40
    %v44 = vlaneseq
    %v45 = vshrl.u32 %v44, 7
    %v46 = vsub.s32 0, %v45
    %v47 = vrot.slane %v37, %v46
    %v48 = vlaneseq
    %v49 = vshrl.u32 %v48, 7
    %v50 = vsub.s32 1, %v49
    %v51 = vrot.slane %v37, %v50
    %v54 = vmul.f32 %v41, %v47
    %v55 = vmul.f32 %v41, %v51
    %56 = vset.pattern.permute.xlu0 4
    %57 = vperm.xlu0 %56, %v36
    %v58 = vpop.permute.xlu0 %57
    %v60 = vadd.f32 %v58, %v54
    %v61 = vadd.f32 %v58, %v55
    %s62 = scalar_lea.vmem [#allocation5], 1
    %v63 = vld [vmem:[%s62] ss:$8 sm:$0x3]
    %64 = vset.pattern.permute.xlu0 1
    %65 = vperm.xlu0 %64, %v36
    %v66 = vpop.permute.xlu0 %65
    %v69 = vlaneseq
    %v70 = vshrl.u32 %v69, 7
    %v71 = vsub.s32 0, %v70
    %v72 = vrot.slane %v63, %v71
    %v73 = vlaneseq
    %v74 = vshrl.u32 %v73, 7
    %v75 = vsub.s32 1, %v74
    %v76 = vrot.slane %v63, %v75
    %v79 = vmul.f32 %v66, %v72
    %v80 = vmul.f32 %v66, %v76
    %v81 = vadd.f32 %v60, %v79
    %v82 = vadd.f32 %v61, %v80
    %s83 = scalar_lea.vmem [#allocation5], 2
    %v84 = vld [vmem:[%s83] ss:$8 sm:$0x3]
    %85 = vset.pattern.permute.xlu0 2
    %86 = vperm.xlu0 %85, %v36
    %v87 = vpop.permute.xlu0 %86
    %v90 = vlaneseq
    %v91 = vshrl.u32 %v90, 7
    %v92 = vsub.s32 0, %v91
    %v93 = vrot.slane %v84, %v92
    %v94 = vlaneseq
    %v95 = vshrl.u32 %v94, 7
    %v96 = vsub.s32 1, %v95
    %v97 = vrot.slane %v84, %v96
    %v100 = vmul.f32 %v87, %v93
    %v101 = vmul.f32 %v87, %v97
    %v102 = vadd.f32 %v81, %v100
    %v103 = vadd.f32 %v82, %v101
    %s104 = scalar_lea.vmem [#allocation5], 3
    %v105 = vld [vmem:[%s104] ss:$8 sm:$0x3]
    %106 = vset.pattern.permute.xlu0 3
    %107 = vperm.xlu0 %106, %v36
    %v108 = vpop.permute.xlu0 %107
    %v111 = vlaneseq
    %v112 = vshrl.u32 %v111, 7
    %v113 = vsub.s32 0, %v112
    %v114 = vrot.slane %v105, %v113
    %v115 = vlaneseq
    %v116 = vshrl.u32 %v115, 7
    %v117 = vsub.s32 1, %v116
    %v118 = vrot.slane %v105, %v117
    %v121 = vmul.f32 %v108, %v114
    %v122 = vmul.f32 %v108, %v118
    %v123 = vadd.f32 %v102, %v121
    %v124 = vadd.f32 %v103, %v122
    %v125 = vmul.f32 %v123, 0.5
    %v126 = vmul.f32 %v124, 0.5
    %v127 = vtanh.pop %v125
    %v128 = vtanh.pop %v126
    %vm129 = vcmp.ne.f32.partialorder %v127, %v127
    %vm130 = vcmp.ne.f32.partialorder %v128, %v128
    %v131 = vsel %vm129, -1.0, %v127
    %v132 = vsel %vm130, -1.0, %v128
    %vm133 = vcmask 1044480
    %v134 = vsel %vm133, %v131, 0.0
    %v135 = vrot.slane %v134, 4
    %v136 = vadd.f32 %v134, %v135
    %v137 = vrot.slane %v136, 2
    %v138 = vadd.f32 %v136, %v137
    %v139 = vrot.slane %v138, 1
    %v140 = vadd.f32 %v138, %v139
    %v141 = vsel %vm133, %v132, 0.0
    %v142 = vrot.slane %v141, 4
    %v143 = vadd.f32 %v141, %v142
    %v144 = vrot.slane %v143, 2
    %v145 = vadd.f32 %v143, %v144
    %v146 = vrot.slane %v145, 1
    %v147 = vadd.f32 %v145, %v146
    %v148 = vmul.f32 %v140, 0.2
    %v149 = vmul.f32 %v147, 0.2
    %v150 = vmul.f32 %v148, 0.5
    %v151 = vmul.f32 %v149, 0.5
    %v152 = vadd.f32 %v150, 0.5
    %v153 = vadd.f32 %v151, 0.5
    %v156 = vcombine.low %v152, %v153
    %v158 = vunpack.c.l.s4 1966171168
    %v159 = vunpack.c.0.s8 %v158
    %v160 = vlaneseq
    %v161 = vshrl.u32 %v160, 7
    %v162 = vsub.s32 %v159, %v161
    %v163 = vrot.slane %v156, %v162
    %v165 = vunpack.c.l.s4 1966171168
    %v166 = vunpack.c.0.s8 %v165
    %v167 = vlaneseq
    %v168 = vshrl.u32 %v167, 7
    %v169 = vsub.s32 %v166, %v168
    %v170 = vrot.slane %v163, %v169
    %v172 = vlaneseq
    %vm173 = vcmp.ge.s32.totalorder %v172, 0
    %vm174 = vcmp.lt.s32.totalorder %v172, 256
    %vm175 = vmand %vm173, %vm174
    %176 = vst.msk [vmem:[#allocation7] ss:$2 sm:$0x3] %vm175, %v170
    %s177 = scalar_lea.vmem [#allocation5], 4
    %v178 = vld [vmem:[%s177] ss:$8 sm:$0x3]
    %v180 = vlaneseq
    %v181 = vshrl.u32 %v180, 7
    %v182 = vsub.s32 0, %v181
    %v183 = vrot.slane %v178, %v182
    %v184 = vlaneseq
    %v185 = vshrl.u32 %v184, 7
    %v186 = vsub.s32 1, %v185
    %v187 = vrot.slane %v178, %v186
    %v190 = vmul.f32 %v41, %v183
    %v191 = vmul.f32 %v41, %v187
    %v192 = vadd.f32 %v58, %v190
    %v193 = vadd.f32 %v58, %v191
    %s194 = scalar_lea.vmem [#allocation5], 5
    %v195 = vld [vmem:[%s194] ss:$8 sm:$0x3]
    %v197 = vlaneseq
    %v198 = vshrl.u32 %v197, 7
    %v199 = vsub.s32 0, %v198
    %v200 = vrot.slane %v195, %v199
    %v201 = vlaneseq
    %v202 = vshrl.u32 %v201, 7
    %v203 = vsub.s32 1, %v202
    %v204 = vrot.slane %v195, %v203
    %v207 = vmul.f32 %v66, %v200
    %v208 = vmul.f32 %v66, %v204
    %v209 = vadd.f32 %v192, %v207
    %v210 = vadd.f32 %v193, %v208
    %s211 = scalar_lea.vmem [#allocation5], 6
    %v212 = vld [vmem:[%s211] ss:$8 sm:$0x3]
    %v214 = vlaneseq
    %v215 = vshrl.u32 %v214, 7
    %v216 = vsub.s32 0, %v215
    %v217 = vrot.slane %v212, %v216
    %v218 = vlaneseq
    %v219 = vshrl.u32 %v218, 7
    %v220 = vsub.s32 1, %v219
    %v221 = vrot.slane %v212, %v220
    %v224 = vmul.f32 %v87, %v217
    %v225 = vmul.f32 %v87, %v221
    %v226 = vadd.f32 %v209, %v224
    %v227 = vadd.f32 %v210, %v225
    %s228 = scalar_lea.vmem [#allocation5], 7
    %v229 = vld [vmem:[%s228] ss:$8 sm:$0x3]
    %v231 = vlaneseq
    %v232 = vshrl.u32 %v231, 7
    %v233 = vsub.s32 0, %v232
    %v234 = vrot.slane %v229, %v233
    %v235 = vlaneseq
    %v236 = vshrl.u32 %v235, 7
    %v237 = vsub.s32 1, %v236
    %v238 = vrot.slane %v229, %v237
    %v241 = vmul.f32 %v108, %v234
    %v242 = vmul.f32 %v108, %v238
    %v243 = vadd.f32 %v226, %v241
    %v244 = vadd.f32 %v227, %v242
    %v245 = vmul.f32 %v243, 0.5
    %v246 = vmul.f32 %v244, 0.5
    %v247 = vtanh.pop %v245
    %v248 = vtanh.pop %v246
    %vm249 = vcmp.ne.f32.partialorder %v247, %v247
    %vm250 = vcmp.ne.f32.partialorder %v248, %v248
    %v251 = vsel %vm249, -1.0, %v247
    %v252 = vsel %vm250, -1.0, %v248
    %v253 = vsel %vm133, %v251, 0.0
    %v254 = vrot.slane %v253, 4
    %v255 = vadd.f32 %v253, %v254
    %v256 = vrot.slane %v255, 2
    %v257 = vadd.f32 %v255, %v256
    %v258 = vrot.slane %v257, 1
    %v259 = vadd.f32 %v257, %v258
    %v260 = vsel %vm133, %v252, 0.0
    %v261 = vrot.slane %v260, 4
    %v262 = vadd.f32 %v260, %v261
    %v263 = vrot.slane %v262, 2
    %v264 = vadd.f32 %v262, %v263
    %v265 = vrot.slane %v264, 1
    %v266 = vadd.f32 %v264, %v265
    %v267 = vmul.f32 %v259, 0.2
    %v268 = vmul.f32 %v266, 0.2
    %v269 = vmul.f32 %v267, 0.5
    %v270 = vmul.f32 %v268, 0.5
    %v271 = vadd.f32 %v269, 0.5
    %v272 = vadd.f32 %v270, 0.5
    %v275 = vcombine.low %v271, %v272
    %v277 = vunpack.c.l.s4 1966171168
    %v278 = vunpack.c.0.s8 %v277
    %v279 = vlaneseq
    %v280 = vshrl.u32 %v279, 7
    %v281 = vsub.s32 %v278, %v280
    %v282 = vrot.slane %v275, %v281
    %v284 = vunpack.c.l.s4 1966171168
    %v285 = vunpack.c.0.s8 %v284
    %v286 = vlaneseq
    %v287 = vshrl.u32 %v286, 7
    %v288 = vsub.s32 %v285, %v287
    %v289 = vrot.slane %v282, %v288
    %s291 = scalar_lea.vmem [#allocation7], 1
    %292 = vst.msk [vmem:[%s291] ss:$2 sm:$0x3] %vm175, %v289
    // Predicated region
    $region18: #{tpu_custom_call.1} parent=1 // pred_check
      _
    $region19: #{tpu_custom_call.1} parent=1 // pred_check_branch
      %294 = sbr.rel (0) target = $region21
    $region20: #{tpu_custom_call.1} parent=1 // pred_region
      %s296 = ssub.s32 64, 64
      %297 = vsyncadd [#allocation4], %s296
      %s299 = sshll.u32 [#allocation7], 4
      %s300 = int_to_ptr.vmem [resolvable:$true] %s299
      %302 = dma.vmem_to_hbm [thread:$0]  %s300, 64, %s2, [#allocation4]
    $region21: #{tpu_custom_call.1} parent=1 // pred_fallthru
      _
    // Predicated region
    $region22: #{tpu_custom_call.1} parent=1 // pred_check
      _
    $region23: #{tpu_custom_call.1} parent=1 // pred_check_branch
      %304 = sbr.rel (0) target = $region25
    $region24: #{tpu_custom_call.1} parent=1 // pred_region
      %305 = dma.done [#allocation4], 64
    $region25: #{tpu_custom_call.1} parent=1 // pred_fallthru
      _
    %306 = vsyncpa [#allocation3], 1
    %307 = vsyncpa [#allocation6], 1
    %308 = vsyncpa [#allocation4], 1

</llo_original>
